<compile_context>
chip_gen: v6e
topology: v6e:2x2x1
jax: 0.10.0
libtpu: 0.0.40
codegen_flags: <defaults>
</compile_context>

<pallas_src>
import functools

import jax
import jax.numpy as jnp
from jax import lax
from jax.experimental import pallas as pl
from jax.experimental.pallas import tpu as pltpu


def _score_kernel(za_ref, zdt_ref, out_ref):
    # (tm, d_pad) bf16  @  (d_pad, tn) bf16  ->  (tm, tn) f32 accumulate.
    # RHS is already K-major (pre-transposed in the wrapper): no in-kernel
    # transpose, single MXU contraction, lane dim of the store is tn (128-dense).
    out_ref[...] = lax.dot_general(
        za_ref[...], zdt_ref[...],
        dimension_numbers=(((1,), (0,)), ((), ())),
        preferred_element_type=jnp.float32,
    ).astype(out_ref.dtype)


@functools.partial(jax.jit,
                   static_argnames=("tm", "tn", "out_dtype", "force_pallas"))
def asymmetric_single_scalar(z_src, z_dst, w_a, w_b, *, tm=256, tn=256,
                             out_dtype=jnp.float32, force_pallas=False):
    """Pallas forward of AsymmetricSingleScalar; returns flattened (N*M,) scores.

    tm/tn default to 256 (MXU-native, safe on v5e/v6e/v7x VMEM budgets). On
    v6e (128 MiB VMEM) raise to 512-1024 for large N, M; on v5e consider
    out_dtype=jnp.bfloat16 to relieve the store/HBM path in the small-dim
    (output-bound) regime.
    """
    n, dim = z_src.shape
    m, dim2 = z_dst.shape
    assert dim == dim2 == w_a.shape[0] == w_a.shape[1] == w_b.shape[0] == w_b.shape[1]

    # --- Hoisted (one-time) work: reassociated weight + row projection. -----
    #   (zs @ W_A^T) @ (zd @ W_B^T)^T  ==  (zs @ (W_A^T @ W_B)) @ zd^T
    # Both matmuls below run ONCE in XLA (O(d^3) + O(N*d^2)); the kernel keeps
    # only the dominant O(N*M*d) score matmul and never re-does the projection
    # per j-tile (previous version redid it M/tn times).
    w_eff = w_a.astype(jnp.float32).T @ w_b.astype(jnp.float32)     # (d, d)
    za = z_src.astype(jnp.float32) @ w_eff                           # (N, d)

    # Small-problem dispatch: kernel launch + (8,128)/tile padding dominate
    # below ~1M MACs; let XLA finish the job.
    if (not force_pallas) and (n * m * dim < (1 << 20)):
        return (za @ z_dst.astype(jnp.float32).T).reshape(-1).astype(out_dtype)

    # --- Padding (all numerically free: zeros contribute nothing). ----------
    #   N, M -> tile multiples   : lane-dense output tiles, unmasked stores.
    #   dim  -> multiple of 128  : full vreg lanes / full MXU contraction.
    n_pad = pl.cdiv(n, tm) * tm
    m_pad = pl.cdiv(m, tn) * tn
    d_pad = pl.cdiv(dim, 128) * 128

    # bf16 MXU operands (f32 accumulation happens inside the kernel).
    za_bf = jnp.pad(za, ((0, n_pad - n), (0, d_pad - dim))).astype(jnp.bfloat16)
    # K-major RHS: (d_pad, m_pad); kernel RHS tile is (d_pad, tn).
    zdt_bf = jnp.pad(z_dst.astype(jnp.float32).T,
                     ((0, d_pad - dim), (0, m_pad - m))).astype(jnp.bfloat16)

    grid = (n_pad // tm, m_pad // tn)

    # Corrected cost hints:
    #  * flops: only the score matmul lives in the kernel now.
    #  * bytes: za is DMA'd once per i-tile (index_map constant in j), z_dst is
    #    re-streamed once per i-tile (grid[0] times), output written once.
    out_bytes = jnp.dtype(out_dtype).itemsize
    flops = 2 * n_pad * m_pad * d_pad
    bytes_accessed = (2 * n_pad * d_pad
                      + grid[0] * 2 * d_pad * m_pad
                      + out_bytes * n_pad * m_pad)

    # Explicit VMEM budget: double-buffered input tiles + double-buffered
    # output tile, with 2x headroom; floor at 32 MiB (above v5e's 16 MiB scoped
    # default), cap at 64 MiB (v7x physical VMEM).
    tile_vmem = 2 * (tm * d_pad * 2 + d_pad * tn * 2 + tm * tn * out_bytes)
    vmem_limit = int(min(max(2 * tile_vmem, 32 * 1024 * 1024), 64 * 1024 * 1024))

    out = pl.pallas_call(
        _score_kernel,
        out_shape=jax.ShapeDtypeStruct((n_pad, m_pad), out_dtype),
        grid_spec=pltpu.PrefetchScalarGridSpec(
            num_scalar_prefetch=0,
            grid=grid,
            in_specs=[
                # za row-tile: block index constant in j -> fetched once per i.
                pl.BlockSpec((tm, d_pad), lambda i, j: (i, 0)),
                # z_dst^T col-tile: K-major, lanes = tn.
                pl.BlockSpec((d_pad, tn), lambda i, j: (0, j)),
            ],
            out_specs=pl.BlockSpec((tm, tn), lambda i, j: (i, j)),
        ),
        compiler_params=pltpu.CompilerParams(
            # No cross-iteration state -> both axes independent; lets megacore
            # (v7x 2 TCs) shard either grid axis.
            dimension_semantics=("parallel", "parallel"),
            vmem_limit_bytes=vmem_limit,
        ),
        cost_estimate=pl.CostEstimate(
            flops=flops, transcendentals=0, bytes_accessed=bytes_accessed),
    )(za_bf, zdt_bf)

    # Glue: drop padding, match torch's .reshape(-1).
    return out[:n, :m].reshape(-1)


if __name__ == "__main__":
    key = jax.random.PRNGKey(0)
    k1, k2, k3, k4 = jax.random.split(key, 4)

    N, M, DIM = 8, 8, 32

    # deterministic "parameter" init (like nn.Linear weights, shape (dim, dim))
    bound = 1.0 / (DIM ** 0.5)
    w_a = jax.random.uniform(k1, (DIM, DIM), jnp.float32, -bound, bound)
    w_b = jax.random.uniform(k2, (DIM, DIM), jnp.float32, -bound, bound)

    z_src = jax.random.normal(k3, (N, DIM), jnp.float32)
    z_dst = jax.random.normal(k4, (M, DIM), jnp.float32)

    # force_pallas=True so the tiny demo actually exercises the Pallas kernel
    # (production dispatch would route this size to plain XLA).
    out = asymmetric_single_scalar(z_src, z_dst, w_a, w_b, force_pallas=True)
    out = jax.block_until_ready(out)

    # Reference check in plain JAX (original, non-reassociated torch formula, f32).
    ref = ((z_src @ w_a.T) @ (z_dst @ w_b.T).T).reshape(-1)
    assert out.shape == (N * M,)
    # Reassociation + bf16 MXU operands (f32 accumulate) change FP rounding vs
    # the f32 reference -> tolerance check, not bitwise.
    assert jnp.allclose(out, ref, atol=5e-2, rtol=5e-2), float(
        jnp.max(jnp.abs(out - ref)))

    print("KERNEL_OK")
</pallas_src>

<mosaic_0001>
module attributes {stable_mosaic.version = 11 : i64} {
  func.func @_score_kernel(%arg0: i32, %arg1: i32, %arg2: memref<256x128xbf16, #tpu.memory_space<vmem>>, %arg3: memref<128x256xbf16, #tpu.memory_space<vmem>>, %arg4: memref<256x256xf32, #tpu.memory_space<vmem>>) attributes {dimension_semantics = [#tpu.dimension_semantics<parallel>, #tpu.dimension_semantics<parallel>], iteration_bounds = array<i64: 1, 1>, scalar_prefetch = 0 : i64, scratch_operands = 0 : i64, tpu.core_type = #tpu.core_type<tc>, window_params = [{transform_indices = @transform_0, window_bounds = array<i64: 256, 128>}, {transform_indices = @transform_1, window_bounds = array<i64: 128, 256>}, {transform_indices = @transform_2, window_bounds = array<i64: 256, 256>}]} {
    %c0 = arith.constant 0 : index
    %c0_0 = arith.constant 0 : index
    %0 = vector.load %arg2[%c0, %c0_0] : memref<256x128xbf16, #tpu.memory_space<vmem>>, vector<256x128xbf16>
    %c0_1 = arith.constant 0 : index
    %c0_2 = arith.constant 0 : index
    %1 = vector.load %arg3[%c0_1, %c0_2] : memref<128x256xbf16, #tpu.memory_space<vmem>>, vector<128x256xbf16>
    %cst = arith.constant dense<0.000000e+00> : vector<256x256xf32>
    %2 = tpu.matmul %0, %1, %cst {dimension_numbers = #tpu.dot_dimension_numbers<[1], [0], [0], [1], [0, 0, 1, 1], [], []>} : vector<256x128xbf16>, vector<128x256xbf16>, vector<256x256xf32> -> vector<256x256xf32>
    %c0_3 = arith.constant 0 : index
    %c0_4 = arith.constant 0 : index
    %3 = vector.load %arg4[%c0_3, %c0_4] : memref<256x256xf32, #tpu.memory_space<vmem>>, vector<256x256xf32>
    tpu.vector_store %arg4[%c0_3, %c0_4], %2 {strides = array<i32>} : memref<256x256xf32, #tpu.memory_space<vmem>>, vector<256x256xf32>,
    return
  }
  func.func @transform_0(%arg0: i32, %arg1: i32) -> (i32, i32) {
    %c0_i32 = arith.constant 0 : i32
    %c0_i32_0 = arith.constant 0 : i32
    return %arg0, %c0_i32 : i32, i32
  }
  func.func @transform_1(%arg0: i32, %arg1: i32) -> (i32, i32) {
    %c0_i32 = arith.constant 0 : i32
    %c0_i32_0 = arith.constant 0 : i32
    return %c0_i32, %arg1 : i32, i32
  }
  func.func @transform_2(%arg0: i32, %arg1: i32) -> (i32, i32) {
    %c0_i32 = arith.constant 0 : i32
    return %arg0, %arg1 : i32, i32
  }
}

</mosaic_0001>

<llo_original>
// kernel: asymmetric_single_scalar.1
$region0: #{asymmetric_single_scalar.1}
  #allocation0 [shape = 'u32[]', space=smem, size = 0x4, offset = 0x4, fixed_abs, tag = 'smem constant byte address 0x4 - core index']
  #allocation1 [shape = 'u32[144,128]{1,0:T(1,128)}', space=vmem, size = 0x12000, scoped, tag = 'internal scratch']
  %s0 = inlined_call_operand.vmem [shape: bf16[256,128], index: 0, kind: input, shape index: {}]
  %s1 = inlined_call_operand.vmem [shape: bf16[128,256], index: 1, kind: input, shape index: {}]
  %s2 = inlined_call_operand.vmem [shape: f32[256,256], index: 2, kind: output, shape index: {}]
  %s3 = sld [smem:[#allocation0]]
  $region18: #{asymmetric_single_scalar.1} parent=0
    _
  %s5 = ssub.s32 1, %s3
  %s6 = scalar_select 0, %s5, %s3
  // Predicated region
  $region2: #{asymmetric_single_scalar.1} parent=0 // pred_check
    _
  $region3: #{asymmetric_single_scalar.1} parent=0 // pred_check_branch
    %8 = sbr.rel (0) target = $region5
  $region4: #{asymmetric_single_scalar.1} parent=0 // pred_region
    _
  $region5: #{asymmetric_single_scalar.1} parent=0 // pred_fallthru
    _
  // Predicated region
  $region6: #{asymmetric_single_scalar.1} parent=0 // pred_check
    _
  $region7: #{asymmetric_single_scalar.1} parent=0 // pred_check_branch
    %10 = sbr.rel (0) target = $region9
  $region8: #{asymmetric_single_scalar.1} parent=0 // pred_region
    _
  $region9: #{asymmetric_single_scalar.1} parent=0 // pred_fallthru
    _
  %v12 = vld [vmem:[%s0] sm:$0xf]
  %v13 = vld [vmem:[%s0 + $0x4] sm:$0xf]
  %v14 = vld [vmem:[%s0 + $0x8] sm:$0xf]
  %v15 = vld [vmem:[%s0 + $0xc] sm:$0xf]
  %v16 = vld [vmem:[%s0 + $0x10] sm:$0xf]
  %v17 = vld [vmem:[%s0 + $0x14] sm:$0xf]
  %v18 = vld [vmem:[%s0 + $0x18] sm:$0xf]
  %v19 = vld [vmem:[%s0 + $0x1c] sm:$0xf]
  %v20 = vld [vmem:[%s0 + $0x20] sm:$0xf]
  %v21 = vld [vmem:[%s0 + $0x24] sm:$0xf]
  %v22 = vld [vmem:[%s0 + $0x28] sm:$0xf]
  %v23 = vld [vmem:[%s0 + $0x2c] sm:$0xf]
  %v24 = vld [vmem:[%s0 + $0x30] sm:$0xf]
  %v25 = vld [vmem:[%s0 + $0x34] sm:$0xf]
  %v26 = vld [vmem:[%s0 + $0x38] sm:$0xf]
  %v27 = vld [vmem:[%s0 + $0x3c] sm:$0xf]
  %v28 = vld [vmem:[%s0 + $0x40] sm:$0xf]
  %v29 = vld [vmem:[%s0 + $0x44] sm:$0xf]
  %v30 = vld [vmem:[%s0 + $0x48] sm:$0xf]
  %v31 = vld [vmem:[%s0 + $0x4c] sm:$0xf]
  %v32 = vld [vmem:[%s0 + $0x50] sm:$0xf]
  %v33 = vld [vmem:[%s0 + $0x54] sm:$0xf]
  %v34 = vld [vmem:[%s0 + $0x58] sm:$0xf]
  %v35 = vld [vmem:[%s0 + $0x5c] sm:$0xf]
  %v36 = vld [vmem:[%s0 + $0x60] sm:$0xf]
  %v37 = vld [vmem:[%s0 + $0x64] sm:$0xf]
  %v38 = vld [vmem:[%s0 + $0x68] sm:$0xf]
  %v39 = vld [vmem:[%s0 + $0x6c] sm:$0xf]
  %v40 = vld [vmem:[%s0 + $0x70] sm:$0xf]
  %v41 = vld [vmem:[%s0 + $0x74] sm:$0xf]
  %v42 = vld [vmem:[%s0 + $0x78] sm:$0xf]
  %v43 = vld [vmem:[%s0 + $0x7c] sm:$0xf]
  %v44 = vld [vmem:[%s1] sm:$0xff]
  %v45 = vld [vmem:[%s1 + $0x8] sm:$0xff]
  %v46 = vld [vmem:[%s1 + $0x10] sm:$0xff]
  %v47 = vld [vmem:[%s1 + $0x18] sm:$0xff]
  %v48 = vld [vmem:[%s1 + $0x20] sm:$0xff]
  %v49 = vld [vmem:[%s1 + $0x28] sm:$0xff]
  %v50 = vld [vmem:[%s1 + $0x30] sm:$0xff]
  %v51 = vld [vmem:[%s1 + $0x38] sm:$0xff]
  %v52 = vld [vmem:[%s1 + $0x40] sm:$0xff]
  %v53 = vld [vmem:[%s1 + $0x48] sm:$0xff]
  %v54 = vld [vmem:[%s1 + $0x50] sm:$0xff]
  %v55 = vld [vmem:[%s1 + $0x58] sm:$0xff]
  %v56 = vld [vmem:[%s1 + $0x60] sm:$0xff]
  %v57 = vld [vmem:[%s1 + $0x68] sm:$0xff]
  %v58 = vld [vmem:[%s1 + $0x70] sm:$0xff]
  %v59 = vld [vmem:[%s1 + $0x78] sm:$0xff]
  %v92 = vunpack.c.l.b16 %v12
  %v93 = vunpack.c.l.b16 %v13
  %v94 = vunpack.c.l.b16 %v14
  %v95 = vunpack.c.l.b16 %v15
  %v96 = vunpack.c.l.b16 %v16
  %v97 = vunpack.c.l.b16 %v17
  %v98 = vunpack.c.l.b16 %v18
  %v99 = vunpack.c.l.b16 %v19
  %v100 = vunpack.c.l.b16 %v20
  %v101 = vunpack.c.l.b16 %v21
  %v102 = vunpack.c.l.b16 %v22
  %v103 = vunpack.c.l.b16 %v23
  %v104 = vunpack.c.l.b16 %v24
  %v105 = vunpack.c.l.b16 %v25
  %v106 = vunpack.c.l.b16 %v26
  %v107 = vunpack.c.l.b16 %v27
  %v108 = vunpack.c.l.b16 %v28
  %v109 = vunpack.c.l.b16 %v29
  %v110 = vunpack.c.l.b16 %v30
  %v111 = vunpack.c.l.b16 %v31
  %v112 = vunpack.c.l.b16 %v32
  %v113 = vunpack.c.l.b16 %v33
  %v114 = vunpack.c.l.b16 %v34
  %v115 = vunpack.c.l.b16 %v35
  %v116 = vunpack.c.l.b16 %v36
  %v117 = vunpack.c.l.b16 %v37
  %v118 = vunpack.c.l.b16 %v38
  %v119 = vunpack.c.l.b16 %v39
  %v120 = vunpack.c.l.b16 %v40
  %v121 = vunpack.c.l.b16 %v41
  %v122 = vunpack.c.l.b16 %v42
  %v123 = vunpack.c.l.b16 %v43
  %v124 = vpack.c.b16 %v93, %v92
  %v125 = vpack.c.b16 %v95, %v94
  %v126 = vpack.c.b16 %v97, %v96
  %v127 = vpack.c.b16 %v99, %v98
  %v128 = vpack.c.b16 %v101, %v100
  %v129 = vpack.c.b16 %v103, %v102
  %v130 = vpack.c.b16 %v105, %v104
  %v131 = vpack.c.b16 %v107, %v106
  %v132 = vpack.c.b16 %v109, %v108
  %v133 = vpack.c.b16 %v111, %v110
  %v134 = vpack.c.b16 %v113, %v112
  %v135 = vpack.c.b16 %v115, %v114
  %v136 = vpack.c.b16 %v117, %v116
  %v137 = vpack.c.b16 %v119, %v118
  %v138 = vpack.c.b16 %v121, %v120
  %v139 = vpack.c.b16 %v123, %v122
  %v172 = vunpack.c.l.b16 %v44
  %v173 = vunpack.c.h.b16 %v44
  %v174 = vunpack.c.l.b16 %v45
  %v175 = vunpack.c.h.b16 %v45
  %v176 = vunpack.c.l.b16 %v46
  %v177 = vunpack.c.h.b16 %v46
  %v178 = vunpack.c.l.b16 %v47
  %v179 = vunpack.c.h.b16 %v47
  %v180 = vunpack.c.l.b16 %v48
  %v181 = vunpack.c.h.b16 %v48
  %v182 = vunpack.c.l.b16 %v49
  %v183 = vunpack.c.h.b16 %v49
  %v184 = vunpack.c.l.b16 %v50
  %v185 = vunpack.c.h.b16 %v50
  %v186 = vunpack.c.l.b16 %v51
  %v187 = vunpack.c.h.b16 %v51
  %v188 = vunpack.c.l.b16 %v52
  %v189 = vunpack.c.h.b16 %v52
  %v190 = vunpack.c.l.b16 %v53
  %v191 = vunpack.c.h.b16 %v53
  %v192 = vunpack.c.l.b16 %v54
  %v193 = vunpack.c.h.b16 %v54
  %v194 = vunpack.c.l.b16 %v55
  %v195 = vunpack.c.h.b16 %v55
  %v196 = vunpack.c.l.b16 %v56
  %v197 = vunpack.c.h.b16 %v56
  %v198 = vunpack.c.l.b16 %v57
  %v199 = vunpack.c.h.b16 %v57
  %v200 = vunpack.c.l.b16 %v58
  %v201 = vunpack.c.h.b16 %v58
  %v202 = vunpack.c.l.b16 %v59
  %v203 = vunpack.c.h.b16 %v59
  %v204 = vpack.c.b16 %v174, %v172
  %v205 = vpack.c.b16 %v175, %v173
  %v206 = vpack.c.b16 %v178, %v176
  %v207 = vpack.c.b16 %v179, %v177
  %v208 = vpack.c.b16 %v182, %v180
  %v209 = vpack.c.b16 %v183, %v181
  %v210 = vpack.c.b16 %v186, %v184
  %v211 = vpack.c.b16 %v187, %v185
  %v212 = vpack.c.b16 %v190, %v188
  %v213 = vpack.c.b16 %v191, %v189
  %v214 = vpack.c.b16 %v194, %v192
  %v215 = vpack.c.b16 %v195, %v193
  %v216 = vpack.c.b16 %v198, %v196
  %v217 = vpack.c.b16 %v199, %v197
  %v218 = vpack.c.b16 %v202, %v200
  %v219 = vpack.c.b16 %v203, %v201
  %236 = vmatprep.subr.bf16.mxu0 %v219
  %237 = vmatpush1.bf16.msra.mxu0 %v218
  %238 = vmatprep.subr.bf16.mxu0 %v217
  %239 = vmatpush1.bf16.msra.mxu0 %v216
  %240 = vmatprep.subr.bf16.mxu0 %v215
  %241 = vmatpush1.bf16.msra.mxu0 %v214
  %242 = vmatprep.subr.bf16.mxu0 %v213
  %243 = vmatpush1.bf16.msra.mxu0 %v212
  %244 = vmatprep.subr.bf16.mxu0 %v211
  %245 = vmatpush1.bf16.msra.mxu0 %v210
  %246 = vmatprep.subr.bf16.mxu0 %v209
  %247 = vmatpush1.bf16.msra.mxu0 %v208
  %248 = vmatprep.subr.bf16.mxu0 %v207
  %249 = vmatpush1.bf16.msra.mxu0 %v206
  %250 = vmatprep.subr.bf16.mxu0 %v205
  %251 = vmatpush1.bf16.msra.mxu0 %v204
  %252 = vmatprep.subr.bf16.mxu0 0
  %253 = vmatpush2.bf16.msra.mxu0 0
  %254 = vmatprep.subr.bf16.mxu0 0
  %255 = vmatpush2.bf16.msra.mxu0 0
  %256 = vmatprep.subr.bf16.mxu0 0
  %257 = vmatpush2.bf16.msra.mxu0 0
  %258 = vmatprep.subr.bf16.mxu0 0
  %259 = vmatpush2.bf16.msra.mxu0 0
  %260 = vmatprep.subr.bf16.mxu0 0
  %261 = vmatpush2.bf16.msra.mxu0 0
  %262 = vmatprep.subr.bf16.mxu0 0
  %263 = vmatpush2.bf16.msra.mxu0 0
  %264 = vmatprep.subr.bf16.mxu0 0
  %265 = vmatpush2.bf16.msra.mxu0 0
  %266 = vmatprep.subr.bf16.mxu0 0
  %267 = vmatpush2.bf16.msra.mxu0 0
  %268 = vmatprep.mubr.bf16.mxu0 0
  %269 = vmatmul.mubr.bf16.gmra.mxu0 %v124
  %v270 = vpop.f32.mrf.mxu0
  %v271 = vadd.f32 0.0, %v270
  %v272 = vpop.f32.mrf.mxu0
  %v273 = vadd.f32 0.0, %v272
  %v274 = vpop.f32.mrf.mxu0
  %v275 = vadd.f32 0.0, %v274
  %v276 = vpop.f32.mrf.mxu0
  %v277 = vadd.f32 0.0, %v276
  %278 = vmatprep.mubr.bf16.mxu0 0
  %279 = vmatmul.mubr.bf16.gmra.mxu0 %v125
  %v280 = vpop.f32.mrf.mxu0
  %v281 = vadd.f32 0.0, %v280
  %v282 = vpop.f32.mrf.mxu0
  %v283 = vadd.f32 0.0, %v282
  %v284 = vpop.f32.mrf.mxu0
  %v285 = vadd.f32 0.0, %v284
  %v286 = vpop.f32.mrf.mxu0
  %v287 = vadd.f32 0.0, %v286
  %288 = vmatprep.mubr.bf16.mxu0 0
  %289 = vmatmul.mubr.bf16.gmra.mxu0 %v126
  %v290 = vpop.f32.mrf.mxu0
  %v291 = vadd.f32 0.0, %v290
  %v292 = vpop.f32.mrf.mxu0
  %v293 = vadd.f32 0.0, %v292
  %v294 = vpop.f32.mrf.mxu0
  %v295 = vadd.f32 0.0, %v294
  %v296 = vpop.f32.mrf.mxu0
  %v297 = vadd.f32 0.0, %v296
  %298 = vmatprep.mubr.bf16.mxu0 0
  %299 = vmatmul.mubr.bf16.gmra.mxu0 %v127
  %v300 = vpop.f32.mrf.mxu0
  %v301 = vadd.f32 0.0, %v300
  %v302 = vpop.f32.mrf.mxu0
  %v303 = vadd.f32 0.0, %v302
  %v304 = vpop.f32.mrf.mxu0
  %v305 = vadd.f32 0.0, %v304
  %v306 = vpop.f32.mrf.mxu0
  %v307 = vadd.f32 0.0, %v306
  %308 = vmatprep.mubr.bf16.mxu0 0
  %309 = vmatmul.mubr.bf16.gmra.mxu0 %v128
  %v310 = vpop.f32.mrf.mxu0
  %v311 = vadd.f32 0.0, %v310
  %v312 = vpop.f32.mrf.mxu0
  %v313 = vadd.f32 0.0, %v312
  %v314 = vpop.f32.mrf.mxu0
  %v315 = vadd.f32 0.0, %v314
  %v316 = vpop.f32.mrf.mxu0
  %v317 = vadd.f32 0.0, %v316
  %318 = vmatprep.mubr.bf16.mxu0 0
  %319 = vmatmul.mubr.bf16.gmra.mxu0 %v129
  %v320 = vpop.f32.mrf.mxu0
  %v321 = vadd.f32 0.0, %v320
  %v322 = vpop.f32.mrf.mxu0
  %v323 = vadd.f32 0.0, %v322
  %v324 = vpop.f32.mrf.mxu0
  %v325 = vadd.f32 0.0, %v324
  %v326 = vpop.f32.mrf.mxu0
  %v327 = vadd.f32 0.0, %v326
  %328 = vmatprep.mubr.bf16.mxu0 0
  %329 = vmatmul.mubr.bf16.gmra.mxu0 %v130
  %v330 = vpop.f32.mrf.mxu0
  %v331 = vadd.f32 0.0, %v330
  %v332 = vpop.f32.mrf.mxu0
  %v333 = vadd.f32 0.0, %v332
  %v334 = vpop.f32.mrf.mxu0
  %v335 = vadd.f32 0.0, %v334
  %v336 = vpop.f32.mrf.mxu0
  %v337 = vadd.f32 0.0, %v336
  %338 = vmatprep.mubr.bf16.mxu0 0
  %339 = vmatmul.mubr.bf16.gmra.mxu0 %v131
  %v340 = vpop.f32.mrf.mxu0
  %v341 = vadd.f32 0.0, %v340
  %v342 = vpop.f32.mrf.mxu0
  %v343 = vadd.f32 0.0, %v342
  %v344 = vpop.f32.mrf.mxu0
  %v345 = vadd.f32 0.0, %v344
  %v346 = vpop.f32.mrf.mxu0
  %v347 = vadd.f32 0.0, %v346
  %348 = vmatprep.mubr.bf16.mxu0 0
  %349 = vmatmul.mubr.bf16.gmra.mxu0 %v132
  %v350 = vpop.f32.mrf.mxu0
  %v351 = vadd.f32 0.0, %v350
  %v352 = vpop.f32.mrf.mxu0
  %v353 = vadd.f32 0.0, %v352
  %v354 = vpop.f32.mrf.mxu0
  %v355 = vadd.f32 0.0, %v354
  %v356 = vpop.f32.mrf.mxu0
  %v357 = vadd.f32 0.0, %v356
  %358 = vmatprep.mubr.bf16.mxu0 0
  %359 = vmatmul.mubr.bf16.gmra.mxu0 %v133
  %v360 = vpop.f32.mrf.mxu0
  %v361 = vadd.f32 0.0, %v360
  %v362 = vpop.f32.mrf.mxu0
  %v363 = vadd.f32 0.0, %v362
  %v364 = vpop.f32.mrf.mxu0
  %v365 = vadd.f32 0.0, %v364
  %v366 = vpop.f32.mrf.mxu0
  %v367 = vadd.f32 0.0, %v366
  %368 = vmatprep.mubr.bf16.mxu0 0
  %369 = vmatmul.mubr.bf16.gmra.mxu0 %v134
  %v370 = vpop.f32.mrf.mxu0
  %v371 = vadd.f32 0.0, %v370
  %v372 = vpop.f32.mrf.mxu0
  %v373 = vadd.f32 0.0, %v372
  %v374 = vpop.f32.mrf.mxu0
  %v375 = vadd.f32 0.0, %v374
  %v376 = vpop.f32.mrf.mxu0
  %v377 = vadd.f32 0.0, %v376
  %378 = vmatprep.mubr.bf16.mxu0 0
  %379 = vmatmul.mubr.bf16.gmra.mxu0 %v135
  %v380 = vpop.f32.mrf.mxu0
  %v381 = vadd.f32 0.0, %v380
  %v382 = vpop.f32.mrf.mxu0
  %v383 = vadd.f32 0.0, %v382
  %v384 = vpop.f32.mrf.mxu0
  %v385 = vadd.f32 0.0, %v384
  %v386 = vpop.f32.mrf.mxu0
  %v387 = vadd.f32 0.0, %v386
  %388 = vmatprep.mubr.bf16.mxu0 0
  %389 = vmatmul.mubr.bf16.gmra.mxu0 %v136
  %v390 = vpop.f32.mrf.mxu0
  %v391 = vadd.f32 0.0, %v390
  %v392 = vpop.f32.mrf.mxu0
  %v393 = vadd.f32 0.0, %v392
  %v394 = vpop.f32.mrf.mxu0
  %v395 = vadd.f32 0.0, %v394
  %v396 = vpop.f32.mrf.mxu0
  %v397 = vadd.f32 0.0, %v396
  %398 = vmatprep.mubr.bf16.mxu0 0
  %399 = vmatmul.mubr.bf16.gmra.mxu0 %v137
  %v400 = vpop.f32.mrf.mxu0
  %v401 = vadd.f32 0.0, %v400
  %v402 = vpop.f32.mrf.mxu0
  %v403 = vadd.f32 0.0, %v402
  %v404 = vpop.f32.mrf.mxu0
  %v405 = vadd.f32 0.0, %v404
  %v406 = vpop.f32.mrf.mxu0
  %v407 = vadd.f32 0.0, %v406
  %408 = vmatprep.mubr.bf16.mxu0 0
  %409 = vmatmul.mubr.bf16.gmra.mxu0 %v138
  %v410 = vpop.f32.mrf.mxu0
  %v411 = vadd.f32 0.0, %v410
  %v412 = vpop.f32.mrf.mxu0
  %v413 = vadd.f32 0.0, %v412
  %v414 = vpop.f32.mrf.mxu0
  %v415 = vadd.f32 0.0, %v414
  %v416 = vpop.f32.mrf.mxu0
  %v417 = vadd.f32 0.0, %v416
  %418 = vmatprep.mubr.bf16.mxu0 0
  %419 = vmatmul.mubr.bf16.gmra.mxu0 %v139
  %v420 = vpop.f32.mrf.mxu0
  %v421 = vadd.f32 0.0, %v420
  %v422 = vpop.f32.mrf.mxu0
  %v423 = vadd.f32 0.0, %v422
  %v424 = vpop.f32.mrf.mxu0
  %v425 = vadd.f32 0.0, %v424
  %v426 = vpop.f32.mrf.mxu0
  %v427 = vadd.f32 0.0, %v426
  %428 = vdwg.mxu0
  %429 = vst [vmem:[%s2] sm:$0xff] %v271
  %430 = vst [vmem:[%s2 + $0x8] sm:$0xff] %v273
  %431 = vst [vmem:[%s2 + $0x10] sm:$0xff] %v275
  %432 = vst [vmem:[%s2 + $0x18] sm:$0xff] %v277
  %433 = vst [vmem:[%s2 + $0x20] sm:$0xff] %v281
  %434 = vst [vmem:[%s2 + $0x28] sm:$0xff] %v283
  %435 = vst [vmem:[%s2 + $0x30] sm:$0xff] %v285
  %436 = vst [vmem:[%s2 + $0x38] sm:$0xff] %v287
  %437 = vst [vmem:[%s2 + $0x40] sm:$0xff] %v291
  %438 = vst [vmem:[%s2 + $0x48] sm:$0xff] %v293
  %439 = vst [vmem:[%s2 + $0x50] sm:$0xff] %v295
  %440 = vst [vmem:[%s2 + $0x58] sm:$0xff] %v297
  %441 = vst [vmem:[%s2 + $0x60] sm:$0xff] %v301
  %442 = vst [vmem:[%s2 + $0x68] sm:$0xff] %v303
  %443 = vst [vmem:[%s2 + $0x70] sm:$0xff] %v305
  %444 = vst [vmem:[%s2 + $0x78] sm:$0xff] %v307
  %445 = vst [vmem:[%s2 + $0x80] sm:$0xff] %v311
  %446 = vst [vmem:[%s2 + $0x88] sm:$0xff] %v313
  %447 = vst [vmem:[%s2 + $0x90] sm:$0xff] %v315
  %448 = vst [vmem:[%s2 + $0x98] sm:$0xff] %v317
  %449 = vst [vmem:[%s2 + $0xa0] sm:$0xff] %v321
  %450 = vst [vmem:[%s2 + $0xa8] sm:$0xff] %v323
  %451 = vst [vmem:[%s2 + $0xb0] sm:$0xff] %v325
  %452 = vst [vmem:[%s2 + $0xb8] sm:$0xff] %v327
  %453 = vst [vmem:[%s2 + $0xc0] sm:$0xff] %v331
  %454 = vst [vmem:[%s2 + $0xc8] sm:$0xff] %v333
  %455 = vst [vmem:[%s2 + $0xd0] sm:$0xff] %v335
  %456 = vst [vmem:[%s2 + $0xd8] sm:$0xff] %v337
  %457 = vst [vmem:[%s2 + $0xe0] sm:$0xff] %v341
  %458 = vst [vmem:[%s2 + $0xe8] sm:$0xff] %v343
  %459 = vst [vmem:[%s2 + $0xf0] sm:$0xff] %v345
  %460 = vst [vmem:[%s2 + $0xf8] sm:$0xff] %v347
  %461 = vst [vmem:[%s2 + $0x100] sm:$0xff] %v351
  %462 = vst [vmem:[%s2 + $0x108] sm:$0xff] %v353
  %463 = vst [vmem:[%s2 + $0x110] sm:$0xff] %v355
  %464 = vst [vmem:[%s2 + $0x118] sm:$0xff] %v357
  %465 = vst [vmem:[%s2 + $0x120] sm:$0xff] %v361
  %466 = vst [vmem:[%s2 + $0x128] sm:$0xff] %v363
  %467 = vst [vmem:[%s2 + $0x130] sm:$0xff] %v365
  %468 = vst [vmem:[%s2 + $0x138] sm:$0xff] %v367
  %469 = vst [vmem:[%s2 + $0x140] sm:$0xff] %v371
  %470 = vst [vmem:[%s2 + $0x148] sm:$0xff] %v373
  %471 = vst [vmem:[%s2 + $0x150] sm:$0xff] %v375
  %472 = vst [vmem:[%s2 + $0x158] sm:$0xff] %v377
  %473 = vst [vmem:[%s2 + $0x160] sm:$0xff] %v381
  %474 = vst [vmem:[%s2 + $0x168] sm:$0xff] %v383
  %475 = vst [vmem:[%s2 + $0x170] sm:$0xff] %v385
  %476 = vst [vmem:[%s2 + $0x178] sm:$0xff] %v387
  %477 = vst [vmem:[%s2 + $0x180] sm:$0xff] %v391
  %478 = vst [vmem:[%s2 + $0x188] sm:$0xff] %v393
  %479 = vst [vmem:[%s2 + $0x190] sm:$0xff] %v395
  %480 = vst [vmem:[%s2 + $0x198] sm:$0xff] %v397
  %481 = vst [vmem:[%s2 + $0x1a0] sm:$0xff] %v401
  %482 = vst [vmem:[%s2 + $0x1a8] sm:$0xff] %v403
  %483 = vst [vmem:[%s2 + $0x1b0] sm:$0xff] %v405
  %484 = vst [vmem:[%s2 + $0x1b8] sm:$0xff] %v407
  %485 = vst [vmem:[%s2 + $0x1c0] sm:$0xff] %v411
  %486 = vst [vmem:[%s2 + $0x1c8] sm:$0xff] %v413
  %487 = vst [vmem:[%s2 + $0x1d0] sm:$0xff] %v415
  %488 = vst [vmem:[%s2 + $0x1d8] sm:$0xff] %v417
  %489 = vst [vmem:[%s2 + $0x1e0] sm:$0xff] %v421
  %490 = vst [vmem:[%s2 + $0x1e8] sm:$0xff] %v423
  %491 = vst [vmem:[%s2 + $0x1f0] sm:$0xff] %v425
  %492 = vst [vmem:[%s2 + $0x1f8] sm:$0xff] %v427
  // Predicated region
  $region10: #{asymmetric_single_scalar.1} parent=0 // pred_check
    _
  $region11: #{asymmetric_single_scalar.1} parent=0 // pred_check_branch
    %494 = sbr.rel (0) target = $region13
  $region12: #{asymmetric_single_scalar.1} parent=0 // pred_region
    _
  $region13: #{asymmetric_single_scalar.1} parent=0 // pred_fallthru
    _
  // Predicated region
  $region14: #{asymmetric_single_scalar.1} parent=0 // pred_check
    _
  $region15: #{asymmetric_single_scalar.1} parent=0 // pred_check_branch
    %496 = sbr.rel (0) target = $region17
  $region16: #{asymmetric_single_scalar.1} parent=0 // pred_region
    _
  $region17: #{asymmetric_single_scalar.1} parent=0 // pred_fallthru
    _

</llo_original>
